<compile_context>
chip_gen: v7x
topology: tpu7x:2x2x1
jax: 0.10.0
libtpu: 0.0.40
codegen_flags: <defaults>
</compile_context>

<pallas_src>
import functools

import jax
import jax.numpy as jnp
from jax import lax
from jax.experimental import pallas as pl
from jax.experimental.pallas import tpu as pltpu


def _center_loss_kernel(labels_ref, x_ref, centers_ref, out_ref, acc_ref,
                        *, batch, num_classes):
    t = pl.program_id(0)
    n_tiles = pl.num_programs(0)
    b_tile = x_ref.shape[0]

    @pl.when(t == 0)
    def _():
        acc_ref[...] = jnp.zeros_like(acc_ref)

    # One-hot gather of the labeled center row for every sample in this tile,
    # done as a single (b_tile, C) @ (C, D) matmul on the (otherwise idle) MXU.
    labels = labels_ref[...]                                           # (b_tile, 1) i32
    class_ids = lax.broadcasted_iota(jnp.int32, (b_tile, num_classes), 1)
    onehot = (labels == class_ids).astype(jnp.float32)                 # (b_tile, C)
    centers = centers_ref[...].astype(jnp.float32)                     # (C, D) resident
    c = jnp.dot(onehot, centers, preferred_element_type=jnp.float32)   # (b_tile, D)

    xf = x_ref[...].astype(jnp.float32)                                # (b_tile, D)
    diff = xf - c
    d = jnp.sum(diff * diff, axis=1, keepdims=True)                    # ||x_i - c_{y_i}||^2
    d = jnp.clip(d, 1e-12, 1.0e12)                                     # clamp "real" entries

    # Mask padded tail rows (batch was zero-padded up to a multiple of b_tile).
    row = lax.broadcasted_iota(jnp.int32, (b_tile, 1), 0) + t * b_tile
    d = jnp.where(row < batch, d, jnp.float32(0.0))

    acc_ref[...] += d                                                  # deferred reduction

    @pl.when(t == n_tiles - 1)
    def _():
        total = jnp.sum(acc_ref[...])
        # Post-mask clamp quirk: every masked-out (zero) entry of the PyTorch
        # (B, C) dist matrix clamps to 1e-12 -> B*(C-1)*1e-12 extra in the sum.
        quirk = jnp.float32(float(batch * (num_classes - 1)) * 1e-12)
        out_ref[0, 0] = (total + quirk) / jnp.float32(batch)


def _round_up(x, m):
    return (x + m - 1) // m * m


def center_loss(x, centers, labels, *, b_tile=512,
                vmem_budget_bytes=40 * 1024 * 1024, interpret=False):
    """x: (B, D) float, centers: (C, D) float, labels: (B,) int -> scalar loss."""
    batch, feat_dim = x.shape
    num_classes, cdim = centers.shape
    assert cdim == feat_dim

    # Resident-centers path (centers stay in VMEM for the whole grid).
    centers_bytes = 2 * num_classes * feat_dim * 4  # worst case: double-buffered
    # TODO(synk): HBM-gather + double-buffered scratch fallback for centers
    # tables that exceed the VMEM budget (see header note).
    assert centers_bytes <= vmem_budget_bytes // 2, (
        "centers table too large for the resident-VMEM path")

    # Pick the largest batch tile (multiple of 8) that fits the VMEM budget:
    # x double-buffer + labels + onehot/c/diff temporaries + accumulator.
    per_row_bytes = 4 * (4 * feat_dim + num_classes + 8)
    fit_rows = max(8, (vmem_budget_bytes - centers_bytes) // per_row_bytes)
    b_tile = int(min(b_tile, fit_rows, _round_up(batch, 8)))
    b_tile = max(8, (b_tile // 8) * 8)

    padded = _round_up(batch, b_tile)
    n_tiles = padded // b_tile

    if padded != batch:
        x = jnp.pad(x, ((0, padded - batch), (0, 0)))
        labels = jnp.pad(labels, (0, padded - batch))
    labels_i32 = labels.astype(jnp.int32).reshape(padded, 1)

    kernel = functools.partial(_center_loss_kernel,
                               batch=batch, num_classes=num_classes)

    out = pl.pallas_call(
        kernel,
        out_shape=jax.ShapeDtypeStruct((1, 1), jnp.float32),
        grid=(n_tiles,),
        in_specs=[
            # labels: tiled alongside x (used for on-chip one-hot gather).
            pl.BlockSpec((b_tile, 1), lambda t: (t, 0)),
            # x: auto-pipelined batch tiles.
            pl.BlockSpec((b_tile, feat_dim), lambda t: (t, 0)),
            # centers: resident in VMEM for the whole grid (constant index map).
            pl.BlockSpec((num_classes, feat_dim), lambda t: (0, 0)),
        ],
        out_specs=pl.BlockSpec(memory_space=pltpu.MemorySpace.SMEM),
        scratch_shapes=[
            pltpu.VMEM((b_tile, 1), jnp.float32),   # resident accumulator
        ],
        compiler_params=pltpu.CompilerParams(
            # Accumulator is carried across the batch-tile axis -> arbitrary.
            dimension_semantics=("arbitrary",),
            # Explicit scoped-VMEM limit: above v5e's 16 MiB default, below
            # v7x's 64 MiB physical.
            vmem_limit_bytes=int(min(vmem_budget_bytes + (8 << 20), 56 << 20)),
        ),
        interpret=interpret,
    )(labels_i32, x, centers)
    return out[0, 0]


def _reference_loss(x, centers, labels):
    """Pure-JAX replica of the exact PyTorch forward (distmat + mask + clamp)."""
    batch = x.shape[0]
    num_classes = centers.shape[0]
    distmat = (
        jnp.sum(x * x, axis=1, keepdims=True)
        + jnp.sum(centers * centers, axis=1)[None, :]
        - 2.0 * x @ centers.T
    )
    mask = (labels[:, None] == jnp.arange(num_classes)[None, :]).astype(jnp.float32)
    return jnp.sum(jnp.clip(distmat * mask, 1e-12, 1.0e12)) / batch


if __name__ == "__main__":
    num_classes, feat_dim = 10, 32

    key = jax.random.PRNGKey(0)
    kx, kc, kl = jax.random.split(key, 3)

    # Case 1: small, tile-aligned batch (single grid step with the big default).
    batch = 16
    x = jax.random.normal(kx, (batch, feat_dim), dtype=jnp.float32)
    centers = jax.random.normal(kc, (num_classes, feat_dim), dtype=jnp.float32)
    labels = jax.random.randint(kl, (batch,), 0, num_classes, dtype=jnp.int32)

    loss = center_loss(x, centers, labels)
    jax.block_until_ready(loss)
    ref = _reference_loss(x, centers, labels)
    assert jnp.allclose(loss, ref, rtol=1e-4, atol=1e-5), (loss, ref)

    # Case 2: non-multiple batch with a small forced tile, exercising the
    # multi-step accumulator path and the tail-row masking.
    batch2 = 20
    x2 = jax.random.normal(kx, (batch2, feat_dim), dtype=jnp.float32)
    labels2 = jax.random.randint(kl, (batch2,), 0, num_classes, dtype=jnp.int32)
    loss2 = center_loss(x2, centers, labels2, b_tile=8)
    jax.block_until_ready(loss2)
    ref2 = _reference_loss(x2, centers, labels2)
    assert jnp.allclose(loss2, ref2, rtol=1e-4, atol=1e-5), (loss2, ref2)

    print("KERNEL_OK")
</pallas_src>

<mosaic_0001>
module attributes {stable_mosaic.version = 11 : i64} {
  func.func @_center_loss_kernel(%arg0: i32, %arg1: memref<16x1xi32, #tpu.memory_space<vmem>>, %arg2: memref<16x32xf32, #tpu.memory_space<vmem>>, %arg3: memref<10x32xf32, #tpu.memory_space<vmem>>, %arg4: memref<1x1xf32, #tpu.memory_space<smem>>, %arg5: memref<16x1xf32, #tpu.memory_space<vmem>>) attributes {dimension_semantics = [#tpu.dimension_semantics<arbitrary>], iteration_bounds = array<i64: 1>, scalar_prefetch = 0 : i64, scratch_operands = 1 : i64, tpu.core_type = #tpu.core_type<tc>, window_params = [{transform_indices = @transform_0, window_bounds = array<i64: 16, 1>}, {transform_indices = @transform_1, window_bounds = array<i64: 16, 32>}, {pipeline_mode = #tpu.pipeline_mode<synchronous>, transform_indices = @transform_2, window_bounds = array<i64: 10, 32>}, {transform_indices = @transform_3, window_bounds = array<i64: 1, 1>}]} {
    %c0_i32 = arith.constant 0 : i32
    %0 = arith.cmpi eq, %arg0, %c0_i32 : i32
    %1 = arith.extui %0 : i1 to i32
    %c0_i32_0 = arith.constant 0 : i32
    %2 = arith.cmpi ne, %1, %c0_i32_0 : i32
    scf.if %2 {
      %cst_17 = arith.constant 0.000000e+00 : f32
      %34 = vector.broadcast %cst_17 : f32 to vector<16x1xf32>
      %c0_18 = arith.constant 0 : index
      %c0_19 = arith.constant 0 : index
      %35 = vector.load %arg5[%c0_18, %c0_19] : memref<16x1xf32, #tpu.memory_space<vmem>>, vector<16x1xf32>
      tpu.vector_store %arg5[%c0_18, %c0_19], %34 {strides = array<i32>} : memref<16x1xf32, #tpu.memory_space<vmem>>, vector<16x1xf32>,
    } else {
    }
    %c0 = arith.constant 0 : index
    %c0_1 = arith.constant 0 : index
    %3 = vector.load %arg1[%c0, %c0_1] : memref<16x1xi32, #tpu.memory_space<vmem>>, vector<16x1xi32>
    %4 = tpu.iota {dimensions = array<i32: 1>} : vector<16x10xi32>
    %5 = vector.broadcast %3 : vector<16x1xi32> to vector<16x10xi32>
    %6 = arith.cmpi eq, %5, %4 : vector<16x10xi32>
    %7 = arith.extui %6 : vector<16x10xi1> to vector<16x10xi32>
    %8 = arith.sitofp %7 : vector<16x10xi32> to vector<16x10xf32>
    %c0_2 = arith.constant 0 : index
    %c0_3 = arith.constant 0 : index
    %9 = vector.load %arg3[%c0_2, %c0_3] : memref<10x32xf32, #tpu.memory_space<vmem>>, vector<10x32xf32>
    %cst = arith.constant dense<0.000000e+00> : vector<16x32xf32>
    %10 = tpu.matmul %8, %9, %cst {dimension_numbers = #tpu.dot_dimension_numbers<[1], [0], [0], [1], [0, 0, 1, 1], [], []>} : vector<16x10xf32>, vector<10x32xf32>, vector<16x32xf32> -> vector<16x32xf32>
    %c0_4 = arith.constant 0 : index
    %c0_5 = arith.constant 0 : index
    %11 = vector.load %arg2[%c0_4, %c0_5] : memref<16x32xf32, #tpu.memory_space<vmem>>, vector<16x32xf32>
    %12 = arith.subf %11, %10 : vector<16x32xf32>
    %13 = arith.mulf %12, %12 : vector<16x32xf32>
    %cst_6 = arith.constant dense<0.000000e+00> : vector<16xf32>
    %14 = vector.multi_reduction <add>, %13, %cst_6 [1] : vector<16x32xf32> to vector<16xf32>
    %15 = vector.shape_cast %14 : vector<16xf32> to vector<16x1xf32>
    %cst_7 = arith.constant 9.99999996E-13 : f32
    %cst_8 = arith.constant 9.99999995E+11 : f32
    %16 = vector.broadcast %cst_7 : f32 to vector<16x1xf32>
    %17 = arith.maximumf %16, %15 : vector<16x1xf32>
    %18 = vector.broadcast %cst_8 : f32 to vector<16x1xf32>
    %19 = arith.minimumf %18, %17 : vector<16x1xf32>
    %20 = tpu.iota {dimensions = array<i32: 0>} : vector<16x1xi32>
    %c16_i32 = arith.constant 16 : i32
    %21 = arith.muli %arg0, %c16_i32 : i32
    %22 = vector.broadcast %21 : i32 to vector<16x1xi32>
    %23 = arith.addi %20, %22 : vector<16x1xi32>
    %c16_i32_9 = arith.constant 16 : i32
    %24 = vector.broadcast %c16_i32_9 : i32 to vector<16x1xi32>
    %25 = arith.cmpi slt, %23, %24 : vector<16x1xi32>
    %cst_10 = arith.constant 0.000000e+00 : f32
    %26 = vector.broadcast %cst_10 : f32 to vector<16x1xf32>
    %27 = arith.select %25, %19, %26 : vector<16x1xi1>, vector<16x1xf32>
    %c0_11 = arith.constant 0 : index
    %c0_12 = arith.constant 0 : index
    %28 = vector.load %arg5[%c0_11, %c0_12] : memref<16x1xf32, #tpu.memory_space<vmem>>, vector<16x1xf32>
    %29 = arith.addf %28, %27 : vector<16x1xf32>
    %c0_13 = arith.constant 0 : index
    %c0_14 = arith.constant 0 : index
    %30 = vector.load %arg5[%c0_13, %c0_14] : memref<16x1xf32, #tpu.memory_space<vmem>>, vector<16x1xf32>
    tpu.vector_store %arg5[%c0_13, %c0_14], %29 {strides = array<i32>} : memref<16x1xf32, #tpu.memory_space<vmem>>, vector<16x1xf32>,
    %c0_i32_15 = arith.constant 0 : i32
    %31 = arith.cmpi eq, %arg0, %c0_i32_15 : i32
    %32 = arith.extui %31 : i1 to i32
    %c0_i32_16 = arith.constant 0 : i32
    %33 = arith.cmpi ne, %32, %c0_i32_16 : i32
    scf.if %33 {
      %c0_17 = arith.constant 0 : index
      %c0_18 = arith.constant 0 : index
      %34 = vector.load %arg5[%c0_17, %c0_18] : memref<16x1xf32, #tpu.memory_space<vmem>>, vector<16x1xf32>
      %35 = vector.shape_cast %34 : vector<16x1xf32> to vector<1x16x1xf32>
      %cst_19 = arith.constant dense<0.000000e+00> : vector<1xf32>
      %36 = vector.multi_reduction <add>, %35, %cst_19 [1, 2] : vector<1x16x1xf32> to vector<1xf32>
      %37 = vector.shape_cast %36 : vector<1xf32> to vector<1x1x1xf32>
      %38 = vector.extract %37[0, 0, 0] : f32 from vector<1x1x1xf32>
      %cst_20 = arith.constant 1.440000e-10 : f32
      %39 = arith.addf %38, %cst_20 : f32
      %cst_21 = arith.constant 1.600000e+01 : f32
      %40 = arith.divf %39, %cst_21 : f32
      %c0_22 = arith.constant 0 : index
      %c0_23 = arith.constant 0 : index
      %41 = memref.load %arg4[%c0_22, %c0_23] : memref<1x1xf32, #tpu.memory_space<smem>>
      memref.store %40, %arg4[%c0_22, %c0_23] : memref<1x1xf32, #tpu.memory_space<smem>>
    } else {
    }
    return
  }
  func.func @transform_0(%arg0: i32) -> (i32, i32) {
    %c0_i32 = arith.constant 0 : i32
    %c0_i32_0 = arith.constant 0 : i32
    return %arg0, %c0_i32 : i32, i32
  }
  func.func @transform_1(%arg0: i32) -> (i32, i32) {
    %c0_i32 = arith.constant 0 : i32
    %c0_i32_0 = arith.constant 0 : i32
    return %arg0, %c0_i32 : i32, i32
  }
  func.func @transform_2(%arg0: i32) -> (i32, i32) {
    %c0_i32 = arith.constant 0 : i32
    %c0_i32_0 = arith.constant 0 : i32
    %c0_i32_1 = arith.constant 0 : i32
    return %c0_i32, %c0_i32_0 : i32, i32
  }
  func.func @transform_3(%arg0: i32) -> (i32, i32) {
    %c0_i32 = arith.constant 0 : i32
    %c0_i32_0 = arith.constant 0 : i32
    %c0_i32_1 = arith.constant 0 : i32
    return %c0_i32, %c0_i32_0 : i32, i32
  }
}

</mosaic_0001>

<llo_original>
// kernel: tpu_custom_call.1
$region0: #{tpu_custom_call.1}
  #allocation0 [shape = 'u32[]', space=smem, size = 0x4, offset = 0x4, fixed_abs, tag = 'smem constant byte address 0x4 - core index']
  #allocation1 [shape = 'u32[144,128]{1,0:T(1,128)}', space=vmem, size = 0x12000, scoped, tag = 'internal scratch']
  #allocation2 [shape = 'f32[16,1]{1,0:T(8,128)}', space=vmem, size = 0x2000, scoped, tag = 'scratch operand']
  %s0 = inlined_call_operand.vmem [shape: s32[16,1], index: 0, kind: input, shape index: {}]
  %s1 = inlined_call_operand.vmem [shape: f32[16,32], index: 1, kind: input, shape index: {}]
  %s2 = inlined_call_operand.hbm [shape: f32[10,32], index: 2, kind: input, shape index: {}]
  %s3 = inlined_call_operand.hbm [shape: f32[1,1], index: 3, kind: output, shape index: {}]
  %s4 = sld [smem:[#allocation0]]
  $region34: #{tpu_custom_call.1} parent=0
    _
  %s6 = ssub.s32 1, %s4
  %s7 = scalar_select 0, %s6, %s4
  $region1: #{tpu_custom_call.1} parent=0
    #allocation3 [shape = 'u8[8192]{0}', space=vmem, size = 0x2000, scoped, tag = 'input window, operand 2, single buffered']
    #allocation4 [shape = 's32[1]{0}', space=sflag, size = 0x4, scoped, tag = 'scoped memory for tpu_custom_call.1']
    #allocation5 [shape = 's32[1]{0}', space=sflag, size = 0x4, scoped, tag = 'scoped memory for tpu_custom_call.1']
    #allocation6 [shape = 'u8[512]{0}', space=smem, size = 0x200, scoped, tag = 'output window, operand 0, single buffered']
    %8 = vsyncpa [#allocation4], 0
    %9 = vsyncpa [#allocation5], 0
    // Predicated region
    $region2: #{tpu_custom_call.1} parent=1 // pred_check
      _
    $region3: #{tpu_custom_call.1} parent=1 // pred_check_branch
      %11 = sbr.rel (0) target = $region5
    $region4: #{tpu_custom_call.1} parent=1 // pred_region
      _
    $region5: #{tpu_custom_call.1} parent=1 // pred_fallthru
      _
    // Predicated region
    $region6: #{tpu_custom_call.1} parent=1 // pred_check
      _
    $region7: #{tpu_custom_call.1} parent=1 // pred_check_branch
      %13 = sbr.rel (0) target = $region9
    $region8: #{tpu_custom_call.1} parent=1 // pred_region
      _
    $region9: #{tpu_custom_call.1} parent=1 // pred_fallthru
      _
    // Predicated region
    $region10: #{tpu_custom_call.1} parent=1 // pred_check
      _
    $region11: #{tpu_custom_call.1} parent=1 // pred_check_branch
      %15 = sbr.rel (0) target = $region13
    $region12: #{tpu_custom_call.1} parent=1 // pred_region
      %s17 = ssub.s32 256, 256
      %18 = vsyncadd [#allocation4], %s17
      %s19 = sshll.u32 [#allocation3], 4
      %s20 = int_to_ptr.vmem [resolvable:$true] %s19
      %25 = dma.hbm_to_vmem [thread:$0]  %s2, 256, %s20, [#allocation4], 128, 128, 8
    $region13: #{tpu_custom_call.1} parent=1 // pred_fallthru
      _
    // Predicated region
    $region14: #{tpu_custom_call.1} parent=1 // pred_check
      _
    $region15: #{tpu_custom_call.1} parent=1 // pred_check_branch
      %27 = sbr.rel (0) target = $region17
    $region16: #{tpu_custom_call.1} parent=1 // pred_region
      %28 = dma.done [#allocation4], 256
    $region17: #{tpu_custom_call.1} parent=1 // pred_fallthru
      _
    %p29 = scmp.eq.s32.totalorder 0, 0
    // Predicated region
    $region18: #{tpu_custom_call.1} parent=1 // pred_check
      %p30 = pneg %p29
    $region19: #{tpu_custom_call.1} parent=1 // pred_check_branch
      %32 = sbr.rel (%p30) target = $region21
    $region20: #{tpu_custom_call.1} parent=1 // pred_region
      %vm33 = vcmask 7168
      %34 = vst.msk [vmem:[#allocation2] sm:$0xff] %vm33, 0.0
      %35 = vst.msk [vmem:[#allocation2 + $0x8] sm:$0xff] %vm33, 0.0
    $region21: #{tpu_custom_call.1} parent=1 // pred_fallthru
      _
    %v36 = vld [vmem:[%s0] sm:$0xff]
    %v37 = vld [vmem:[%s0 + $0x8] sm:$0xff]
    %v38 = vlaneseq
    %v39 = vand.u32 %v38, 127
    %40 = vset.pattern.permute.xlu0 0
    %41 = vperm.xlu0 %40, %v36
    %v42 = vpop.permute.xlu0 %41
    %43 = vset.pattern.permute.xlu0 0
    %44 = vperm.xlu0 %43, %v37
    %v45 = vpop.permute.xlu0 %44
    %vm46 = vcmp.eq.s32.totalorder %v42, %v39
    %vm47 = vcmp.eq.s32.totalorder %v45, %v39
    %v48 = vsel %vm46, 1, 0
    %v49 = vsel %vm47, 1, 0
    %v50 = vcvt.s32.f32 %v48
    %v51 = vcvt.s32.f32 %v49
    %v52 = vld [vmem:[#allocation3] sm:$0xff]
    %v53 = vld [vmem:[#allocation3 + $0x8] sm:$0x3]
    %vm54 = vcmask 80896
    %v56 = vsel %vm54, %v50, 0
    %v59 = vsel %vm54, %v51, 0
    %vm61 = vcmask 1041408
    %v63 = vsel %vm61, %v53, 0
    %65 = vmatprep.subr.mxu0 0.0
    %66 = vmatpush1.msra.mxu0 %v52
    %67 = vmatprep.subr.mxu0 0.0
    %68 = vmatpush1.msra.mxu0 %v63
    %69 = vmatprep.subr.mxu0 0.0
    %70 = vmatpush1.msra.mxu0 0.0
    %71 = vmatprep.subr.mxu0 0.0
    %72 = vmatpush1.msra.mxu0 0.0
    %73 = vmatprep.subr.mxu0 0.0
    %74 = vmatpush1.msra.mxu0 0.0
    %75 = vmatprep.subr.mxu0 0.0
    %76 = vmatpush1.msra.mxu0 0.0
    %77 = vmatprep.subr.mxu0 0.0
    %78 = vmatpush1.msra.mxu0 0.0
    %79 = vmatprep.subr.mxu0 0.0
    %80 = vmatpush1.msra.mxu0 0.0
    %81 = vmatprep.subr.mxu0 0.0
    %82 = vmatpush1.msra.mxu0 0.0
    %83 = vmatprep.subr.mxu0 0.0
    %84 = vmatpush1.msra.mxu0 0.0
    %85 = vmatprep.subr.mxu0 0.0
    %86 = vmatpush1.msra.mxu0 0.0
    %87 = vmatprep.subr.mxu0 0.0
    %88 = vmatpush1.msra.mxu0 0.0
    %89 = vmatprep.subr.mxu0 0.0
    %90 = vmatpush1.msra.mxu0 0.0
    %91 = vmatprep.subr.mxu0 0.0
    %92 = vmatpush1.msra.mxu0 0.0
    %93 = vmatprep.subr.mxu0 0.0
    %94 = vmatpush1.msra.mxu0 0.0
    %95 = vmatprep.subr.mxu0 0.0
    %96 = vmatpush1.msra.mxu0 0.0
    %97 = vmatprep.subr.mxu0 0.0
    %98 = vmatpush1.msra.mxu0 0.0
    %99 = vmatprep.subr.mxu0 0.0
    %100 = vmatpush1.msra.mxu0 0.0
    %101 = vmatprep.subr.mxu0 0.0
    %102 = vmatpush1.msra.mxu0 0.0
    %103 = vmatprep.subr.mxu0 0.0
    %104 = vmatpush1.msra.mxu0 0.0
    %105 = vmatprep.subr.mxu0 0.0
    %106 = vmatpush1.msra.mxu0 0.0
    %107 = vmatprep.subr.mxu0 0.0
    %108 = vmatpush1.msra.mxu0 0.0
    %109 = vmatprep.subr.mxu0 0.0
    %110 = vmatpush1.msra.mxu0 0.0
    %111 = vmatprep.subr.mxu0 0.0
    %112 = vmatpush1.msra.mxu0 0.0
    %113 = vmatprep.subr.mxu0 0.0
    %114 = vmatpush1.msra.mxu0 0.0
    %115 = vmatprep.subr.mxu0 0.0
    %116 = vmatpush1.msra.mxu0 0.0
    %117 = vmatprep.subr.mxu0 0.0
    %118 = vmatpush1.msra.mxu0 0.0
    %119 = vmatprep.subr.mxu0 0.0
    %120 = vmatpush1.msra.mxu0 0.0
    %121 = vmatprep.subr.mxu0 0.0
    %122 = vmatpush1.msra.mxu0 0.0
    %123 = vmatprep.subr.mxu0 0.0
    %124 = vmatpush1.msra.mxu0 0.0
    %125 = vmatprep.subr.mxu0 0.0
    %126 = vmatpush1.msra.mxu0 0.0
    %127 = vmatprep.subr.mxu0 0.0
    %128 = vmatpush1.msra.mxu0 0.0
    %129 = vmatprep.mubr.f32.mxu0 0.0
    %130 = vmatmul.mubr.f32.gmra.mrb[0].mxu0 %v56
    %v131 = vpop.f32.mrb[0].mxu0
    %v132 = vadd.f32 0.0, %v131
    %v133 = vpop.f32.mrb[0].mxu0
    %134 = vmatprep.mubr.f32.mxu0 0.0
    %135 = vmatmul.mubr.f32.gmra.mrb[0].mxu0 %v59
    %v136 = vpop.f32.mrb[0].mxu0
    %v137 = vadd.f32 0.0, %v136
    %v138 = vpop.f32.mrb[0].mxu0
    %139 = vdwg.mxu0
    %v140 = vld [vmem:[%s1] sm:$0xff]
    %v141 = vld [vmem:[%s1 + $0x8] sm:$0xff]
    %v142 = vsub.f32 %v140, %v132
    %v143 = vsub.f32 %v141, %v137
    %v144 = vmul.f32 %v142, %v142
    %v145 = vmul.f32 %v143, %v143
    %vm146 = vcmask 261120
    %v147 = vsel %vm146, %v144, 0.0
    %148 = vadd.xlane.f32.xlu0 %v147
    %v149 = vpop.xlane.xlu0 %148
    %v150 = vsel %vm146, %v145, 0.0
    %151 = vadd.xlane.f32.xlu0 %v150
    %v152 = vpop.xlane.xlu0 %151
    %v153 = vmax.f32 %v149, 1e-12
    %v154 = vmax.f32 %v152, 1e-12
    %v155 = vmin.f32 %v153, 1e+12
    %v156 = vmin.f32 %v154, 1e+12
    %v157 = vlaneseq
    %v158 = vshrl.u32 %v157, 7
    %v159 = vadd.s32 %v158, 8
    %s160 = smul.u32 0, 16
    %v161 = vstv %s160
    %v162 = vadd.s32 %v158, %v161
    %v163 = vadd.s32 %v159, %v161
    %vm164 = vcmp.lt.s32.totalorder %v162, 16
    %vm165 = vcmp.lt.s32.totalorder %v163, 16
    %v166 = vsel %vm164, %v155, 0.0
    %v167 = vsel %vm165, %v156, 0.0
    %v168 = vld [vmem:[#allocation2] sm:$0xff]
    %v169 = vld [vmem:[#allocation2 + $0x8] sm:$0xff]
    %v170 = vadd.f32 %v168, %v166
    %v171 = vadd.f32 %v169, %v167
    %vm172 = vcmask 7168
    %173 = vst.msk [vmem:[#allocation2] sm:$0xff] %vm172, %v170
    %174 = vst.msk [vmem:[#allocation2 + $0x8] sm:$0xff] %vm172, %v171
    // Predicated region
    $region22: #{tpu_custom_call.1} parent=1 // pred_check
      %p175 = pneg %p29
    $region23: #{tpu_custom_call.1} parent=1 // pred_check_branch
      %177 = sbr.rel (%p175) target = $region25
    $region24: #{tpu_custom_call.1} parent=1 // pred_region
      %v178 = vld [vmem:[#allocation2] sm:$0xff]
      %v179 = vld [vmem:[#allocation2 + $0x8] sm:$0xff]
      %v180 = vsel %vm172, %v178, 0.0
      %v181 = vsel %vm172, %v179, 0.0
      %v182 = vadd.f32 %v180, %v181
      %183 = vadd.xlane.f32.xlu0 %v182
      %v184 = vpop.xlane.xlu0 %183
      %v185 = vrot.slane %v184, 4
      %v186 = vadd.f32 %v184, %v185
      %v187 = vrot.slane %v186, 2
      %v188 = vadd.f32 %v186, %v187
      %v189 = vrot.slane %v188, 1
      %v190 = vadd.f32 %v188, %v189
      %s191 = vtos %v190
      %s192 = sadd.f32 %s191, 1.44e-10
      %v193 = vrcp.pop 16.0
      %s194 = vtos %v193
      %s195 = smul.f32 %s192, %s194
      %s196 = scalar_lea.smem [#allocation6], 0
      %197 = sst [smem:[%s196]] %s195
    $region25: #{tpu_custom_call.1} parent=1 // pred_fallthru
      _
    // Predicated region
    $region26: #{tpu_custom_call.1} parent=1 // pred_check
      _
    $region27: #{tpu_custom_call.1} parent=1 // pred_check_branch
      %199 = sbr.rel (0) target = $region29
    $region28: #{tpu_custom_call.1} parent=1 // pred_region
      %s201 = ssub.s32 16, 16
      %202 = vsyncadd [#allocation5], %s201
      %205 = dma.smem_to_hbm [#allocation6], 16, %s3, [#allocation5]
    $region29: #{tpu_custom_call.1} parent=1 // pred_fallthru
      _
    // Predicated region
    $region30: #{tpu_custom_call.1} parent=1 // pred_check
      _
    $region31: #{tpu_custom_call.1} parent=1 // pred_check_branch
      %207 = sbr.rel (0) target = $region33
    $region32: #{tpu_custom_call.1} parent=1 // pred_region
      %208 = dma.done [#allocation5], 16
    $region33: #{tpu_custom_call.1} parent=1 // pred_fallthru
      _
    %209 = sfence
    %210 = vsyncpa [#allocation4], 1
    %211 = vsyncpa [#allocation5], 1

</llo_original>
